<compile_context>
chip_gen: v7x
topology: tpu7x:2x2x1
jax: 0.10.0
libtpu: 0.0.40
codegen_flags: <defaults>
</compile_context>

<pallas_src>
import jax
import jax.numpy as jnp
from jax.experimental import pallas as pl
from jax.experimental.pallas import tpu as pltpu

LANE = 128
SUBLANE = 8
DEFAULT_WEIGHTS = (0.7, 0.7, 1.1, 1.1, 0.3, 0.3, 1.3)


def _round_up(x, m):
    return ((x + m - 1) // m) * m


def _make_weighted_loss_kernel(n):
    """Builds a kernel taking (scales_smem, pred_0..pred_{n-1}, target, out)."""

    def kernel(*refs):
        scale_ref = refs[0]          # SMEM (n,): w_i / (numel * sum(w))
        pred_refs = refs[1:1 + n]    # n x VMEM (TR, 128) logits, scale i
        tgt_ref = refs[1 + n]        # VMEM (TR, 128) shared target tile
        out_ref = refs[2 + n]        # VMEM (8, 128) per-tile weighted partial

        t = tgt_ref[...].astype(jnp.float32)
        tr = t.shape[0]

        acc = jnp.zeros((SUBLANE, LANE), dtype=jnp.float32)
        for k in range(n):  # static unroll over the n scale predictions
            x = pred_refs[k][...].astype(jnp.float32)
            # TODO(synk): `_loss_fn` is abstract in the PyTorch module; it is
            # instantiated here as numerically-stable mean BCE-with-logits.
            per_elem = (jnp.maximum(x, 0.0) - x * t
                        + jnp.log1p(jnp.exp(-jnp.abs(x))))
            # Fold (TR,128) -> (8,128): sublane-group VPU adds only.
            partial = per_elem.reshape(tr // SUBLANE, SUBLANE, LANE).sum(axis=0)
            acc = acc + partial * scale_ref[k]

        out_ref[...] = acc

    return kernel


def weighted_loss(predictions, target, weights=DEFAULT_WEIGHTS, tile_rows=512):
    """predictions: list of NCHW arrays (len == len(weights)); target: NCHW array."""
    n = len(predictions)
    assert n == len(weights), \
        "The weights should have the same length as the output of the model"
    assert tile_rows % SUBLANE == 0

    total = int(target.size)
    rows = pl.cdiv(total, LANE)                       # rows of the (rows,128) view
    tr = tile_rows if rows >= tile_rows else _round_up(rows, SUBLANE)
    rows_padded = _round_up(rows, tr)
    pad_n = rows_padded * LANE - total
    num_tiles = rows_padded // tr

    def _prep(x, pad_value):
        flat = x.reshape(-1)
        if pad_n:
            flat = jnp.concatenate(
                [flat, jnp.full((pad_n,), pad_value, dtype=flat.dtype)])
        return flat.reshape(rows_padded, LANE)

    # Padded logits of -1e4 with target 0 contribute exactly 0 to the BCE sum.
    preds = [_prep(p, -1e4) for p in predictions]
    tgt = _prep(target, 0)

    wsum = float(sum(weights))
    scales = jnp.asarray([float(w) / (total * wsum) for w in weights],
                         dtype=jnp.float32)

    tile_spec = pl.BlockSpec((tr, LANE), lambda r: (r, 0))
    partials = pl.pallas_call(
        _make_weighted_loss_kernel(n),
        out_shape=jax.ShapeDtypeStruct((num_tiles * SUBLANE, LANE), jnp.float32),
        grid=(num_tiles,),
        in_specs=([pl.BlockSpec(memory_space=pltpu.MemorySpace.SMEM)]  # scales
                  + [tile_spec] * n                                    # predictions
                  + [tile_spec]),                                      # target
        out_specs=pl.BlockSpec((SUBLANE, LANE), lambda r: (r, 0)),
        compiler_params=pltpu.CompilerParams(
            dimension_semantics=("parallel",)),
    )(scales, *preds, tgt)

    # Tiny final reduce over (num_tiles*8, 128) partials.
    return jnp.sum(partials)


if __name__ == "__main__":
    key = jax.random.PRNGKey(0)
    B, C, H, W = 2, 1, 24, 24            # 1152 elems -> exercises lane + row padding
    n_scales = len(DEFAULT_WEIGHTS)      # 7

    keys = jax.random.split(key, n_scales + 1)
    predictions = [
        jax.random.normal(keys[k], (B, C, H, W), dtype=jnp.float32)
        for k in range(n_scales)
    ]
    target = (jax.random.uniform(keys[-1], (B, C, H, W)) > 0.5).astype(jnp.float32)

    # Pure-JAX reference for the same semantics.
    def _bce_mean(x, t):
        return jnp.mean(jnp.maximum(x, 0.0) - x * t + jnp.log1p(jnp.exp(-jnp.abs(x))))

    ref = sum(_bce_mean(p, target) * lw
              for p, lw in zip(predictions, DEFAULT_WEIGHTS)) / sum(DEFAULT_WEIGHTS)

    # Exercise both the multi-tile path (tile_rows=8 -> 2 R-tiles) and the
    # default single-tile path.
    for tr in (8, 512):
        loss = weighted_loss(predictions, target, tile_rows=tr)
        loss = jax.block_until_ready(loss)
        assert jnp.allclose(loss, ref, atol=1e-5, rtol=1e-5), (tr, loss, ref)

    print("KERNEL_OK")
</pallas_src>

<mosaic_0001>
module attributes {stable_mosaic.version = 11 : i64} {
  func.func @kernel(%arg0: i32, %arg1: memref<7xf32, #tpu.memory_space<smem>>, %arg2: memref<8x128xf32, #tpu.memory_space<vmem>>, %arg3: memref<8x128xf32, #tpu.memory_space<vmem>>, %arg4: memref<8x128xf32, #tpu.memory_space<vmem>>, %arg5: memref<8x128xf32, #tpu.memory_space<vmem>>, %arg6: memref<8x128xf32, #tpu.memory_space<vmem>>, %arg7: memref<8x128xf32, #tpu.memory_space<vmem>>, %arg8: memref<8x128xf32, #tpu.memory_space<vmem>>, %arg9: memref<8x128xf32, #tpu.memory_space<vmem>>, %arg10: memref<8x128xf32, #tpu.memory_space<vmem>>) attributes {dimension_semantics = [#tpu.dimension_semantics<parallel>], iteration_bounds = array<i64: 2>, scalar_prefetch = 0 : i64, scratch_operands = 0 : i64, tpu.core_type = #tpu.core_type<tc>, window_params = [{transform_indices = @transform_0, window_bounds = array<i64: 7>}, {transform_indices = @transform_1, window_bounds = array<i64: 8, 128>}, {transform_indices = @transform_2, window_bounds = array<i64: 8, 128>}, {transform_indices = @transform_3, window_bounds = array<i64: 8, 128>}, {transform_indices = @transform_4, window_bounds = array<i64: 8, 128>}, {transform_indices = @transform_5, window_bounds = array<i64: 8, 128>}, {transform_indices = @transform_6, window_bounds = array<i64: 8, 128>}, {transform_indices = @transform_7, window_bounds = array<i64: 8, 128>}, {transform_indices = @transform_8, window_bounds = array<i64: 8, 128>}, {transform_indices = @transform_9, window_bounds = array<i64: 8, 128>}]} {
    %c0 = arith.constant 0 : index
    %c0_0 = arith.constant 0 : index
    %0 = vector.load %arg9[%c0, %c0_0] : memref<8x128xf32, #tpu.memory_space<vmem>>, vector<8x128xf32>
    %cst = arith.constant 0.000000e+00 : f32
    %1 = vector.broadcast %cst : f32 to vector<8x128xf32>
    %c0_1 = arith.constant 0 : index
    %c0_2 = arith.constant 0 : index
    %2 = vector.load %arg2[%c0_1, %c0_2] : memref<8x128xf32, #tpu.memory_space<vmem>>, vector<8x128xf32>
    %cst_3 = arith.constant 0.000000e+00 : f32
    %3 = vector.broadcast %cst_3 : f32 to vector<8x128xf32>
    %4 = arith.maximumf %2, %3 : vector<8x128xf32>
    %5 = arith.mulf %2, %0 : vector<8x128xf32>
    %6 = arith.subf %4, %5 : vector<8x128xf32>
    %7 = math.absf %2 : vector<8x128xf32>
    %cst_4 = arith.constant 0.000000e+00 : f32
    %8 = vector.broadcast %cst_4 : f32 to vector<8x128xf32>
    %9 = arith.subf %8, %7 : vector<8x128xf32>
    %10 = math.exp %9 : vector<8x128xf32>
    %11 = math.log1p %10 : vector<8x128xf32>
    %12 = arith.addf %6, %11 : vector<8x128xf32>
    %13 = vector.shape_cast %12 : vector<8x128xf32> to vector<1x8x128xf32>
    %cst_5 = arith.constant dense<0.000000e+00> : vector<8x128xf32>
    %14 = vector.multi_reduction <add>, %13, %cst_5 [0] : vector<1x8x128xf32> to vector<8x128xf32>
    %c0_6 = arith.constant 0 : index
    %15 = memref.load %arg1[%c0_6] : memref<7xf32, #tpu.memory_space<smem>>
    %16 = vector.broadcast %15 : f32 to vector<8x128xf32>
    %17 = arith.mulf %14, %16 : vector<8x128xf32>
    %18 = arith.addf %1, %17 : vector<8x128xf32>
    %c0_7 = arith.constant 0 : index
    %c0_8 = arith.constant 0 : index
    %19 = vector.load %arg3[%c0_7, %c0_8] : memref<8x128xf32, #tpu.memory_space<vmem>>, vector<8x128xf32>
    %cst_9 = arith.constant 0.000000e+00 : f32
    %20 = vector.broadcast %cst_9 : f32 to vector<8x128xf32>
    %21 = arith.maximumf %19, %20 : vector<8x128xf32>
    %22 = arith.mulf %19, %0 : vector<8x128xf32>
    %23 = arith.subf %21, %22 : vector<8x128xf32>
    %24 = math.absf %19 : vector<8x128xf32>
    %cst_10 = arith.constant 0.000000e+00 : f32
    %25 = vector.broadcast %cst_10 : f32 to vector<8x128xf32>
    %26 = arith.subf %25, %24 : vector<8x128xf32>
    %27 = math.exp %26 : vector<8x128xf32>
    %28 = math.log1p %27 : vector<8x128xf32>
    %29 = arith.addf %23, %28 : vector<8x128xf32>
    %30 = vector.shape_cast %29 : vector<8x128xf32> to vector<1x8x128xf32>
    %cst_11 = arith.constant dense<0.000000e+00> : vector<8x128xf32>
    %31 = vector.multi_reduction <add>, %30, %cst_11 [0] : vector<1x8x128xf32> to vector<8x128xf32>
    %c1 = arith.constant 1 : index
    %32 = memref.load %arg1[%c1] : memref<7xf32, #tpu.memory_space<smem>>
    %33 = vector.broadcast %32 : f32 to vector<8x128xf32>
    %34 = arith.mulf %31, %33 : vector<8x128xf32>
    %35 = arith.addf %18, %34 : vector<8x128xf32>
    %c0_12 = arith.constant 0 : index
    %c0_13 = arith.constant 0 : index
    %36 = vector.load %arg4[%c0_12, %c0_13] : memref<8x128xf32, #tpu.memory_space<vmem>>, vector<8x128xf32>
    %cst_14 = arith.constant 0.000000e+00 : f32
    %37 = vector.broadcast %cst_14 : f32 to vector<8x128xf32>
    %38 = arith.maximumf %36, %37 : vector<8x128xf32>
    %39 = arith.mulf %36, %0 : vector<8x128xf32>
    %40 = arith.subf %38, %39 : vector<8x128xf32>
    %41 = math.absf %36 : vector<8x128xf32>
    %cst_15 = arith.constant 0.000000e+00 : f32
    %42 = vector.broadcast %cst_15 : f32 to vector<8x128xf32>
    %43 = arith.subf %42, %41 : vector<8x128xf32>
    %44 = math.exp %43 : vector<8x128xf32>
    %45 = math.log1p %44 : vector<8x128xf32>
    %46 = arith.addf %40, %45 : vector<8x128xf32>
    %47 = vector.shape_cast %46 : vector<8x128xf32> to vector<1x8x128xf32>
    %cst_16 = arith.constant dense<0.000000e+00> : vector<8x128xf32>
    %48 = vector.multi_reduction <add>, %47, %cst_16 [0] : vector<1x8x128xf32> to vector<8x128xf32>
    %c2 = arith.constant 2 : index
    %49 = memref.load %arg1[%c2] : memref<7xf32, #tpu.memory_space<smem>>
    %50 = vector.broadcast %49 : f32 to vector<8x128xf32>
    %51 = arith.mulf %48, %50 : vector<8x128xf32>
    %52 = arith.addf %35, %51 : vector<8x128xf32>
    %c0_17 = arith.constant 0 : index
    %c0_18 = arith.constant 0 : index
    %53 = vector.load %arg5[%c0_17, %c0_18] : memref<8x128xf32, #tpu.memory_space<vmem>>, vector<8x128xf32>
    %cst_19 = arith.constant 0.000000e+00 : f32
    %54 = vector.broadcast %cst_19 : f32 to vector<8x128xf32>
    %55 = arith.maximumf %53, %54 : vector<8x128xf32>
    %56 = arith.mulf %53, %0 : vector<8x128xf32>
    %57 = arith.subf %55, %56 : vector<8x128xf32>
    %58 = math.absf %53 : vector<8x128xf32>
    %cst_20 = arith.constant 0.000000e+00 : f32
    %59 = vector.broadcast %cst_20 : f32 to vector<8x128xf32>
    %60 = arith.subf %59, %58 : vector<8x128xf32>
    %61 = math.exp %60 : vector<8x128xf32>
    %62 = math.log1p %61 : vector<8x128xf32>
    %63 = arith.addf %57, %62 : vector<8x128xf32>
    %64 = vector.shape_cast %63 : vector<8x128xf32> to vector<1x8x128xf32>
    %cst_21 = arith.constant dense<0.000000e+00> : vector<8x128xf32>
    %65 = vector.multi_reduction <add>, %64, %cst_21 [0] : vector<1x8x128xf32> to vector<8x128xf32>
    %c3 = arith.constant 3 : index
    %66 = memref.load %arg1[%c3] : memref<7xf32, #tpu.memory_space<smem>>
    %67 = vector.broadcast %66 : f32 to vector<8x128xf32>
    %68 = arith.mulf %65, %67 : vector<8x128xf32>
    %69 = arith.addf %52, %68 : vector<8x128xf32>
    %c0_22 = arith.constant 0 : index
    %c0_23 = arith.constant 0 : index
    %70 = vector.load %arg6[%c0_22, %c0_23] : memref<8x128xf32, #tpu.memory_space<vmem>>, vector<8x128xf32>
    %cst_24 = arith.constant 0.000000e+00 : f32
    %71 = vector.broadcast %cst_24 : f32 to vector<8x128xf32>
    %72 = arith.maximumf %70, %71 : vector<8x128xf32>
    %73 = arith.mulf %70, %0 : vector<8x128xf32>
    %74 = arith.subf %72, %73 : vector<8x128xf32>
    %75 = math.absf %70 : vector<8x128xf32>
    %cst_25 = arith.constant 0.000000e+00 : f32
    %76 = vector.broadcast %cst_25 : f32 to vector<8x128xf32>
    %77 = arith.subf %76, %75 : vector<8x128xf32>
    %78 = math.exp %77 : vector<8x128xf32>
    %79 = math.log1p %78 : vector<8x128xf32>
    %80 = arith.addf %74, %79 : vector<8x128xf32>
    %81 = vector.shape_cast %80 : vector<8x128xf32> to vector<1x8x128xf32>
    %cst_26 = arith.constant dense<0.000000e+00> : vector<8x128xf32>
    %82 = vector.multi_reduction <add>, %81, %cst_26 [0] : vector<1x8x128xf32> to vector<8x128xf32>
    %c4 = arith.constant 4 : index
    %83 = memref.load %arg1[%c4] : memref<7xf32, #tpu.memory_space<smem>>
    %84 = vector.broadcast %83 : f32 to vector<8x128xf32>
    %85 = arith.mulf %82, %84 : vector<8x128xf32>
    %86 = arith.addf %69, %85 : vector<8x128xf32>
    %c0_27 = arith.constant 0 : index
    %c0_28 = arith.constant 0 : index
    %87 = vector.load %arg7[%c0_27, %c0_28] : memref<8x128xf32, #tpu.memory_space<vmem>>, vector<8x128xf32>
    %cst_29 = arith.constant 0.000000e+00 : f32
    %88 = vector.broadcast %cst_29 : f32 to vector<8x128xf32>
    %89 = arith.maximumf %87, %88 : vector<8x128xf32>
    %90 = arith.mulf %87, %0 : vector<8x128xf32>
    %91 = arith.subf %89, %90 : vector<8x128xf32>
    %92 = math.absf %87 : vector<8x128xf32>
    %cst_30 = arith.constant 0.000000e+00 : f32
    %93 = vector.broadcast %cst_30 : f32 to vector<8x128xf32>
    %94 = arith.subf %93, %92 : vector<8x128xf32>
    %95 = math.exp %94 : vector<8x128xf32>
    %96 = math.log1p %95 : vector<8x128xf32>
    %97 = arith.addf %91, %96 : vector<8x128xf32>
    %98 = vector.shape_cast %97 : vector<8x128xf32> to vector<1x8x128xf32>
    %cst_31 = arith.constant dense<0.000000e+00> : vector<8x128xf32>
    %99 = vector.multi_reduction <add>, %98, %cst_31 [0] : vector<1x8x128xf32> to vector<8x128xf32>
    %c5 = arith.constant 5 : index
    %100 = memref.load %arg1[%c5] : memref<7xf32, #tpu.memory_space<smem>>
    %101 = vector.broadcast %100 : f32 to vector<8x128xf32>
    %102 = arith.mulf %99, %101 : vector<8x128xf32>
    %103 = arith.addf %86, %102 : vector<8x128xf32>
    %c0_32 = arith.constant 0 : index
    %c0_33 = arith.constant 0 : index
    %104 = vector.load %arg8[%c0_32, %c0_33] : memref<8x128xf32, #tpu.memory_space<vmem>>, vector<8x128xf32>
    %cst_34 = arith.constant 0.000000e+00 : f32
    %105 = vector.broadcast %cst_34 : f32 to vector<8x128xf32>
    %106 = arith.maximumf %104, %105 : vector<8x128xf32>
    %107 = arith.mulf %104, %0 : vector<8x128xf32>
    %108 = arith.subf %106, %107 : vector<8x128xf32>
    %109 = math.absf %104 : vector<8x128xf32>
    %cst_35 = arith.constant 0.000000e+00 : f32
    %110 = vector.broadcast %cst_35 : f32 to vector<8x128xf32>
    %111 = arith.subf %110, %109 : vector<8x128xf32>
    %112 = math.exp %111 : vector<8x128xf32>
    %113 = math.log1p %112 : vector<8x128xf32>
    %114 = arith.addf %108, %113 : vector<8x128xf32>
    %115 = vector.shape_cast %114 : vector<8x128xf32> to vector<1x8x128xf32>
    %cst_36 = arith.constant dense<0.000000e+00> : vector<8x128xf32>
    %116 = vector.multi_reduction <add>, %115, %cst_36 [0] : vector<1x8x128xf32> to vector<8x128xf32>
    %c6 = arith.constant 6 : index
    %117 = memref.load %arg1[%c6] : memref<7xf32, #tpu.memory_space<smem>>
    %118 = vector.broadcast %117 : f32 to vector<8x128xf32>
    %119 = arith.mulf %116, %118 : vector<8x128xf32>
    %120 = arith.addf %103, %119 : vector<8x128xf32>
    %c0_37 = arith.constant 0 : index
    %c0_38 = arith.constant 0 : index
    %121 = vector.load %arg10[%c0_37, %c0_38] : memref<8x128xf32, #tpu.memory_space<vmem>>, vector<8x128xf32>
    tpu.vector_store %arg10[%c0_37, %c0_38], %120 {strides = array<i32>} : memref<8x128xf32, #tpu.memory_space<vmem>>, vector<8x128xf32>,
    return
  }
  func.func @transform_0(%arg0: i32) -> i32 {
    %c0_i32 = arith.constant 0 : i32
    %c0_i32_0 = arith.constant 0 : i32
    return %c0_i32 : i32
  }
  func.func @transform_1(%arg0: i32) -> (i32, i32) {
    %c0_i32 = arith.constant 0 : i32
    %c0_i32_0 = arith.constant 0 : i32
    return %arg0, %c0_i32 : i32, i32
  }
  func.func @transform_2(%arg0: i32) -> (i32, i32) {
    %c0_i32 = arith.constant 0 : i32
    %c0_i32_0 = arith.constant 0 : i32
    return %arg0, %c0_i32 : i32, i32
  }
  func.func @transform_3(%arg0: i32) -> (i32, i32) {
    %c0_i32 = arith.constant 0 : i32
    %c0_i32_0 = arith.constant 0 : i32
    return %arg0, %c0_i32 : i32, i32
  }
  func.func @transform_4(%arg0: i32) -> (i32, i32) {
    %c0_i32 = arith.constant 0 : i32
    %c0_i32_0 = arith.constant 0 : i32
    return %arg0, %c0_i32 : i32, i32
  }
  func.func @transform_5(%arg0: i32) -> (i32, i32) {
    %c0_i32 = arith.constant 0 : i32
    %c0_i32_0 = arith.constant 0 : i32
    return %arg0, %c0_i32 : i32, i32
  }
  func.func @transform_6(%arg0: i32) -> (i32, i32) {
    %c0_i32 = arith.constant 0 : i32
    %c0_i32_0 = arith.constant 0 : i32
    return %arg0, %c0_i32 : i32, i32
  }
  func.func @transform_7(%arg0: i32) -> (i32, i32) {
    %c0_i32 = arith.constant 0 : i32
    %c0_i32_0 = arith.constant 0 : i32
    return %arg0, %c0_i32 : i32, i32
  }
  func.func @transform_8(%arg0: i32) -> (i32, i32) {
    %c0_i32 = arith.constant 0 : i32
    %c0_i32_0 = arith.constant 0 : i32
    return %arg0, %c0_i32 : i32, i32
  }
  func.func @transform_9(%arg0: i32) -> (i32, i32) {
    %c0_i32 = arith.constant 0 : i32
    %c0_i32_0 = arith.constant 0 : i32
    return %arg0, %c0_i32 : i32, i32
  }
}

</mosaic_0001>

<llo_original>
// kernel: tpu_custom_call.1
$region0: #{tpu_custom_call.1}
  #allocation0 [shape = 'u32[]', space=smem, size = 0x4, offset = 0x4, fixed_abs, tag = 'smem constant byte address 0x4 - core index']
  #allocation1 [shape = 'u32[144,128]{1,0:T(1,128)}', space=vmem, size = 0x12000, scoped, tag = 'internal scratch']
  %s0 = inlined_call_operand.hbm [shape: f32[7], index: 0, kind: input, shape index: {}]
  %s1 = inlined_call_operand.hbm [shape: f32[16,128], index: 1, kind: input, shape index: {}]
  %s2 = inlined_call_operand.hbm [shape: f32[16,128], index: 2, kind: input, shape index: {}]
  %s3 = inlined_call_operand.hbm [shape: f32[16,128], index: 3, kind: input, shape index: {}]
  %s4 = inlined_call_operand.hbm [shape: f32[16,128], index: 4, kind: input, shape index: {}]
  %s5 = inlined_call_operand.vmem [shape: f32[16,128], index: 5, kind: input, shape index: {}]
  %s6 = inlined_call_operand.hbm [shape: f32[16,128], index: 6, kind: input, shape index: {}]
  %s7 = inlined_call_operand.hbm [shape: f32[16,128], index: 7, kind: input, shape index: {}]
  %s8 = inlined_call_operand.hbm [shape: f32[16,128], index: 8, kind: input, shape index: {}]
  %s9 = inlined_call_operand.hbm [shape: f32[16,128], index: 9, kind: output, shape index: {}]
  %s10 = sld [smem:[#allocation0]]
  $region101: #{tpu_custom_call.1} parent=0
    _
  %s12 = ssub.s32 1, %s10
  %s13 = scalar_select 0, %s12, %s10
  $region1: #{tpu_custom_call.1} parent=0
    #allocation2 [shape = 'u8[512]{0}', space=smem, size = 0x200, scoped, tag = 'input window, operand 0, single buffered']
    #allocation3 [shape = 's32[2]{0}', space=sflag, size = 0x8, scoped, tag = 'scoped memory for tpu_custom_call.1']
    #allocation4 [shape = 's32[2]{0}', space=sflag, size = 0x8, scoped, tag = 'scoped memory for tpu_custom_call.1']
    #allocation5 [shape = 's32[2]{0}', space=sflag, size = 0x8, scoped, tag = 'scoped memory for tpu_custom_call.1']
    #allocation6 [shape = 'u8[8192]{0}', space=vmem, size = 0x2000, scoped, tag = 'input window, operand 1']
    #allocation7 [shape = 'u8[8192]{0}', space=vmem, size = 0x2000, scoped, tag = 'input window, operand 2']
    #allocation8 [shape = 's32[2]{0}', space=sflag, size = 0x8, scoped, tag = 'scoped memory for tpu_custom_call.1']
    #allocation9 [shape = 'u8[8192]{0}', space=vmem, size = 0x2000, scoped, tag = 'input window, operand 3']
    #allocation10 [shape = 'u8[8192]{0}', space=vmem, size = 0x2000, scoped, tag = 'input window, operand 4']
    #allocation11 [shape = 's32[2]{0}', space=sflag, size = 0x8, scoped, tag = 'scoped memory for tpu_custom_call.1']
    #allocation12 [shape = 'u8[8192]{0}', space=vmem, size = 0x2000, scoped, tag = 'input window, operand 6']
    #allocation13 [shape = 'u8[8192]{0}', space=vmem, size = 0x2000, scoped, tag = 'input window, operand 7']
    #allocation14 [shape = 's32[2]{0}', space=sflag, size = 0x8, scoped, tag = 'scoped memory for tpu_custom_call.1']
    #allocation15 [shape = 'u8[8192]{0}', space=vmem, size = 0x2000, scoped, tag = 'input window, operand 8']
    #allocation16 [shape = 'u8[8192]{0}', space=vmem, size = 0x2000, scoped, tag = 'output window, operand 0']
    %14 = vsyncpa [#allocation5], 0
    %15 = vsyncpa [#allocation3], 0
    %s16 = scalar_lea.sflag [#allocation3], 1
    %17 = vsyncpa %s16, 0
    %18 = vsyncpa [#allocation8], 0
    %s19 = scalar_lea.sflag [#allocation8], 1
    %20 = vsyncpa %s19, 0
    %21 = vsyncpa [#allocation11], 0
    %s22 = scalar_lea.sflag [#allocation11], 1
    %23 = vsyncpa %s22, 0
    %24 = vsyncpa [#allocation14], 0
    %s25 = scalar_lea.sflag [#allocation14], 1
    %26 = vsyncpa %s25, 0
    %27 = vsyncpa [#allocation4], 0
    %s28 = scalar_lea.sflag [#allocation4], 1
    %29 = vsyncpa %s28, 0
    loop: start=0, step=1, limit=4
    $region2: #{tpu_custom_call.1} parent=1 // loop_pre_header
      _
    $region3: #{tpu_custom_call.1} parent=1 // loop_header
      %s31 = sphi 0, %s35
      %p32 = scmp.ge.s32.totalorder %s31, 4
      %s39 = sphi 0, %s39
      %s41 = sphi 0, %s39
      %s42 = sphi 0, %s41
      %s56 = sphi 0, %s42
      %s62 = sphi 0, %s64
      %s65 = sphi 0, %s62
      %s66 = sphi 0, %s65
      %s82 = sphi 0, %s66
      %s88 = sphi 0, %s90
      %s91 = sphi 0, %s88
      %s92 = sphi 0, %s91
      %s108 = sphi 0, %s92
      %s114 = sphi 0, %s116
      %s117 = sphi 0, %s114
      %s118 = sphi 0, %s117
      %s134 = sphi 0, %s118
      %s140 = sphi 0, %s142
      %s143 = sphi 0, %s140
      %s144 = sphi 0, %s143
      %s160 = sphi 0, %s144
      %s166 = sphi 0, %s168
      %s169 = sphi 0, %s166
      %s170 = sphi 0, %s169
      %s186 = sphi 0, %s170
      %s192 = sphi 0, %s194
      %s195 = sphi 0, %s192
      %s196 = sphi 0, %s195
      %s212 = sphi 0, %s196
      %s218 = sphi 0, %s220
      %s221 = sphi 0, %s218
      %s222 = sphi 0, %s221
      %s238 = sphi 0, %s222
      %s244 = sphi 0, %s246
      %s247 = sphi 0, %s244
      %s248 = sphi 0, %s247
      %s264 = sphi 0, %s248
      %s270 = sphi 0, %s272
      %s273 = sphi 0, %s270
      %s274 = sphi 0, %s273
      %s290 = sphi 0, %s274
    $region4: #{tpu_custom_call.1} parent=1 // loop_header_branch
      %34 = sbr.rel (%p32) target = $region8
    $region5: #{tpu_custom_call.1} parent=1 // loop_body
      %s36 = ssub.s32 %s31, 1
      %s37 = ssub.s32 %s31, 2
      %s38 = sadd.s32 %s31, 1
      %s40 = sadd.s32 %s39, 1
      %p43 = scmp.eq.s32.totalorder %s31, 1
      %p44 = scmp.ne.s32.totalorder %s39, %s41
      %p45 = scmp.eq.s32.totalorder %s31, 0
      %p46 = por %p44, %p45
      %p47 = scmp.ne.s32.totalorder %s39, %s41
      %p48 = scmp.eq.s32.totalorder %s36, 1
      %p49 = por %p47, %p48
      %p50 = scmp.ne.s32.totalorder %s41, %s42
      %p51 = scmp.eq.s32.totalorder %s36, 0
      %p52 = por %p50, %p51
      %p53 = scmp.ne.s32.totalorder %s41, %s42
      %p54 = scmp.eq.s32.totalorder %s37, 1
      %p55 = por %p53, %p54
      %p57 = scmp.ne.s32.totalorder %s42, %s56
      %p58 = scmp.eq.s32.totalorder %s37, 0
      %p59 = por %p57, %p58
      %s60 = ssub.s32 %s31, %s38
      %p61 = scmp.eq.s32.totalorder %s60, 0
      %s63 = sadd.s32 %s62, 1
      %s64 = scalar_select %p61, %s62, %s63
      %p67 = pneg %p61
      %p68 = scmp.eq.s32.totalorder %s31, 1
      %p69 = por %p67, %p68
      %p70 = scmp.ne.s32.totalorder %s62, %s65
      %p71 = scmp.eq.s32.totalorder %s31, 0
      %p72 = por %p70, %p71
      %p73 = scmp.ne.s32.totalorder %s62, %s65
      %p74 = scmp.eq.s32.totalorder %s36, 1
      %p75 = por %p73, %p74
      %p76 = scmp.ne.s32.totalorder %s65, %s66
      %p77 = scmp.eq.s32.totalorder %s36, 0
      %p78 = por %p76, %p77
      %p79 = scmp.ne.s32.totalorder %s65, %s66
      %p80 = scmp.eq.s32.totalorder %s37, 1
      %p81 = por %p79, %p80
      %p83 = scmp.ne.s32.totalorder %s66, %s82
      %p84 = scmp.eq.s32.totalorder %s37, 0
      %p85 = por %p83, %p84
      %s86 = ssub.s32 %s31, %s38
      %p87 = scmp.eq.s32.totalorder %s86, 0
      %s89 = sadd.s32 %s88, 1
      %s90 = scalar_select %p87, %s88, %s89
      %p93 = pneg %p87
      %p94 = scmp.eq.s32.totalorder %s31, 1
      %p95 = por %p93, %p94
      %p96 = scmp.ne.s32.totalorder %s88, %s91
      %p97 = scmp.eq.s32.totalorder %s31, 0
      %p98 = por %p96, %p97
      %p99 = scmp.ne.s32.totalorder %s88, %s91
      %p100 = scmp.eq.s32.totalorder %s36, 1
      %p101 = por %p99, %p100
      %p102 = scmp.ne.s32.totalorder %s91, %s92
      %p103 = scmp.eq.s32.totalorder %s36, 0
      %p104 = por %p102, %p103
      %p105 = scmp.ne.s32.totalorder %s91, %s92
      %p106 = scmp.eq.s32.totalorder %s37, 1
      %p107 = por %p105, %p106
      %p109 = scmp.ne.s32.totalorder %s92, %s108
      %p110 = scmp.eq.s32.totalorder %s37, 0
      %p111 = por %p109, %p110
      %s112 = ssub.s32 %s31, %s38
      %p113 = scmp.eq.s32.totalorder %s112, 0
      %s115 = sadd.s32 %s114, 1
      %s116 = scalar_select %p113, %s114, %s115
      %p119 = pneg %p113
      %p120 = scmp.eq.s32.totalorder %s31, 1
      %p121 = por %p119, %p120
      %p122 = scmp.ne.s32.totalorder %s114, %s117
      %p123 = scmp.eq.s32.totalorder %s31, 0
      %p124 = por %p122, %p123
      %p125 = scmp.ne.s32.totalorder %s114, %s117
      %p126 = scmp.eq.s32.totalorder %s36, 1
      %p127 = por %p125, %p126
      %p128 = scmp.ne.s32.totalorder %s117, %s118
      %p129 = scmp.eq.s32.totalorder %s36, 0
      %p130 = por %p128, %p129
      %p131 = scmp.ne.s32.totalorder %s117, %s118
      %p132 = scmp.eq.s32.totalorder %s37, 1
      %p133 = por %p131, %p132
      %p135 = scmp.ne.s32.totalorder %s118, %s134
      %p136 = scmp.eq.s32.totalorder %s37, 0
      %p137 = por %p135, %p136
      %s138 = ssub.s32 %s31, %s38
      %p139 = scmp.eq.s32.totalorder %s138, 0
      %s141 = sadd.s32 %s140, 1
      %s142 = scalar_select %p139, %s140, %s141
      %p145 = pneg %p139
      %p146 = scmp.eq.s32.totalorder %s31, 1
      %p147 = por %p145, %p146
      %p148 = scmp.ne.s32.totalorder %s140, %s143
      %p149 = scmp.eq.s32.totalorder %s31, 0
      %p150 = por %p148, %p149
      %p151 = scmp.ne.s32.totalorder %s140, %s143
      %p152 = scmp.eq.s32.totalorder %s36, 1
      %p153 = por %p151, %p152
      %p154 = scmp.ne.s32.totalorder %s143, %s144
      %p155 = scmp.eq.s32.totalorder %s36, 0
      %p156 = por %p154, %p155
      %p157 = scmp.ne.s32.totalorder %s143, %s144
      %p158 = scmp.eq.s32.totalorder %s37, 1
      %p159 = por %p157, %p158
      %p161 = scmp.ne.s32.totalorder %s144, %s160
      %p162 = scmp.eq.s32.totalorder %s37, 0
      %p163 = por %p161, %p162
      %s164 = ssub.s32 %s31, %s38
      %p165 = scmp.eq.s32.totalorder %s164, 0
      %s167 = sadd.s32 %s166, 1
      %s168 = scalar_select %p165, %s166, %s167
      %p171 = pneg %p165
      %p172 = scmp.eq.s32.totalorder %s31, 1
      %p173 = por %p171, %p172
      %p174 = scmp.ne.s32.totalorder %s166, %s169
      %p175 = scmp.eq.s32.totalorder %s31, 0
      %p176 = por %p174, %p175
      %p177 = scmp.ne.s32.totalorder %s166, %s169
      %p178 = scmp.eq.s32.totalorder %s36, 1
      %p179 = por %p177, %p178
      %p180 = scmp.ne.s32.totalorder %s169, %s170
      %p181 = scmp.eq.s32.totalorder %s36, 0
      %p182 = por %p180, %p181
      %p183 = scmp.ne.s32.totalorder %s169, %s170
      %p184 = scmp.eq.s32.totalorder %s37, 1
      %p185 = por %p183, %p184
      %p187 = scmp.ne.s32.totalorder %s170, %s186
      %p188 = scmp.eq.s32.totalorder %s37, 0
      %p189 = por %p187, %p188
      %s190 = ssub.s32 %s31, %s38
      %p191 = scmp.eq.s32.totalorder %s190, 0
      %s193 = sadd.s32 %s192, 1
      %s194 = scalar_select %p191, %s192, %s193
      %p197 = pneg %p191
      %p198 = scmp.eq.s32.totalorder %s31, 1
      %p199 = por %p197, %p198
      %p200 = scmp.ne.s32.totalorder %s192, %s195
      %p201 = scmp.eq.s32.totalorder %s31, 0
      %p202 = por %p200, %p201
      %p203 = scmp.ne.s32.totalorder %s192, %s195
      %p204 = scmp.eq.s32.totalorder %s36, 1
      %p205 = por %p203, %p204
      %p206 = scmp.ne.s32.totalorder %s195, %s196
      %p207 = scmp.eq.s32.totalorder %s36, 0
      %p208 = por %p206, %p207
      %p209 = scmp.ne.s32.totalorder %s195, %s196
      %p210 = scmp.eq.s32.totalorder %s37, 1
      %p211 = por %p209, %p210
      %p213 = scmp.ne.s32.totalorder %s196, %s212
      %p214 = scmp.eq.s32.totalorder %s37, 0
      %p215 = por %p213, %p214
      %s216 = ssub.s32 %s31, %s38
      %p217 = scmp.eq.s32.totalorder %s216, 0
      %s219 = sadd.s32 %s218, 1
      %s220 = scalar_select %p217, %s218, %s219
      %p223 = pneg %p217
      %p224 = scmp.eq.s32.totalorder %s31, 1
      %p225 = por %p223, %p224
      %p226 = scmp.ne.s32.totalorder %s218, %s221
      %p227 = scmp.eq.s32.totalorder %s31, 0
      %p228 = por %p226, %p227
      %p229 = scmp.ne.s32.totalorder %s218, %s221
      %p230 = scmp.eq.s32.totalorder %s36, 1
      %p231 = por %p229, %p230
      %p232 = scmp.ne.s32.totalorder %s221, %s222
      %p233 = scmp.eq.s32.totalorder %s36, 0
      %p234 = por %p232, %p233
      %p235 = scmp.ne.s32.totalorder %s221, %s222
      %p236 = scmp.eq.s32.totalorder %s37, 1
      %p237 = por %p235, %p236
      %p239 = scmp.ne.s32.totalorder %s222, %s238
      %p240 = scmp.eq.s32.totalorder %s37, 0
      %p241 = por %p239, %p240
      %s242 = ssub.s32 %s31, %s38
      %p243 = scmp.eq.s32.totalorder %s242, 0
      %s245 = sadd.s32 %s244, 1
      %s246 = scalar_select %p243, %s244, %s245
      %p249 = pneg %p243
      %p250 = scmp.eq.s32.totalorder %s31, 1
      %p251 = por %p249, %p250
      %p252 = scmp.ne.s32.totalorder %s244, %s247
      %p253 = scmp.eq.s32.totalorder %s31, 0
      %p254 = por %p252, %p253
      %p255 = scmp.ne.s32.totalorder %s244, %s247
      %p256 = scmp.eq.s32.totalorder %s36, 1
      %p257 = por %p255, %p256
      %p258 = scmp.ne.s32.totalorder %s247, %s248
      %p259 = scmp.eq.s32.totalorder %s36, 0
      %p260 = por %p258, %p259
      %p261 = scmp.ne.s32.totalorder %s247, %s248
      %p262 = scmp.eq.s32.totalorder %s37, 1
      %p263 = por %p261, %p262
      %p265 = scmp.ne.s32.totalorder %s248, %s264
      %p266 = scmp.eq.s32.totalorder %s37, 0
      %p267 = por %p265, %p266
      %s268 = ssub.s32 %s31, %s38
      %p269 = scmp.eq.s32.totalorder %s268, 0
      %s271 = sadd.s32 %s270, 1
      %s272 = scalar_select %p269, %s270, %s271
      %p275 = pneg %p269
      %p276 = scmp.eq.s32.totalorder %s31, 1
      %p277 = por %p275, %p276
      %p278 = scmp.ne.s32.totalorder %s270, %s273
      %p279 = scmp.eq.s32.totalorder %s31, 0
      %p280 = por %p278, %p279
      %p281 = scmp.ne.s32.totalorder %s270, %s273
      %p282 = scmp.eq.s32.totalorder %s36, 1
      %p283 = por %p281, %p282
      %p284 = scmp.ne.s32.totalorder %s273, %s274
      %p285 = scmp.eq.s32.totalorder %s36, 0
      %p286 = por %p284, %p285
      %p287 = scmp.ne.s32.totalorder %s273, %s274
      %p288 = scmp.eq.s32.totalorder %s37, 1
      %p289 = por %p287, %p288
      %p291 = scmp.ne.s32.totalorder %s274, %s290
      %p292 = scmp.eq.s32.totalorder %s37, 0
      %p293 = por %p291, %p292
      %p294 = scmp.le.s32.totalorder 1, %s31
      %p295 = scmp.lt.s32.totalorder %s31, 3
      %p296 = pnand %p294, %p295
      %p297 = pneg %p296
      // Predicated region
      $region9: #{tpu_custom_call.1} parent=5 // pred_check
        _
      $region10: #{tpu_custom_call.1} parent=5 // pred_check_branch
        %299 = sbr.rel (%p296) target = $region12
      $region11: #{tpu_custom_call.1} parent=5 // pred_region
        %s300 = ssub.s32 %s31, 1
        // Predicated region
        $region13: #{tpu_custom_call.1} parent=11 // pred_check
          %p301 = pneg %p52
        $region14: #{tpu_custom_call.1} parent=11 // pred_check_branch
          %303 = sbr.rel (%p301) target = $region16
        $region15: #{tpu_custom_call.1} parent=11 // pred_region
          %s305 = ssub.s32 16, 16
          %306 = vsyncadd [#allocation5], %s305
          %309 = dma.hbm_to_smem %s0, 16, [#allocation2], [#allocation5]
        $region16: #{tpu_custom_call.1} parent=11 // pred_fallthru
          _
      $region12: #{tpu_custom_call.1} parent=5 // pred_fallthru
        _
      %p310 = scmp.lt.s32.totalorder %s31, 2
      // Predicated region
      $region17: #{tpu_custom_call.1} parent=5 // pred_check
        %p311 = pneg %p310
      $region18: #{tpu_custom_call.1} parent=5 // pred_check_branch
        %313 = sbr.rel (%p311) target = $region20
      $region19: #{tpu_custom_call.1} parent=5 // pred_region
        // Predicated region
        $region21: #{tpu_custom_call.1} parent=19 // pred_check
          %p314 = pneg %p72
        $region22: #{tpu_custom_call.1} parent=19 // pred_check_branch
          %316 = sbr.rel (%p314) target = $region24
        $region23: #{tpu_custom_call.1} parent=19 // pred_region
          %s317 = sand.u32 %s62, 1
          %s318 = scalar_lea.sflag [#allocation3], %s317
          %s319 = sand.u32 %s62, 1
          %s320 = smul.addr %s319, 8
          %s321 = scalar_lea.vmem [#allocation6], %s320
          %s323 = ssub.s32 128, 128
          %324 = vsyncadd %s318, %s323
          %s325 = smul.addr %s31, 128
          %s326 = scalar_lea.hbm %s1, %s325
          %s328 = sshll.u32 %s321, 4
          %s329 = int_to_ptr.vmem [resolvable:$true] %s328
          %331 = dma.hbm_to_vmem [thread:$0]  %s326, 128, %s329, %s318
        $region24: #{tpu_custom_call.1} parent=19 // pred_fallthru
          _
        // Predicated region
        $region25: #{tpu_custom_call.1} parent=19 // pred_check
          %p332 = pneg %p98
        $region26: #{tpu_custom_call.1} parent=19 // pred_check_branch
          %334 = sbr.rel (%p332) target = $region28
        $region27: #{tpu_custom_call.1} parent=19 // pred_region
          %s335 = sand.u32 %s31, 1
          %s336 = scalar_lea.sflag [#allocation8], %s335
          %s337 = sand.u32 %s88, 1
          %s338 = smul.addr %s337, 8
          %s339 = scalar_lea.vmem [#allocation7], %s338
          %s341 = ssub.s32 128, 128
          %342 = vsyncadd %s336, %s341
          %s343 = smul.addr %s31, 128
          %s344 = scalar_lea.hbm %s2, %s343
          %s346 = sshll.u32 %s339, 4
          %s347 = int_to_ptr.vmem [resolvable:$true] %s346
          %349 = dma.hbm_to_vmem [thread:$0]  %s344, 128, %s347, %s336
        $region28: #{tpu_custom_call.1} parent=19 // pred_fallthru
          _
        // Predicated region
        $region29: #{tpu_custom_call.1} parent=19 // pred_check
          %p350 = pneg %p124
        $region30: #{tpu_custom_call.1} parent=19 // pred_check_branch
          %352 = sbr.rel (%p350) target = $region32
        $region31: #{tpu_custom_call.1} parent=19 // pred_region
          %s353 = sand.u32 %s31, 1
          %s354 = scalar_lea.sflag [#allocation8], %s353
          %s355 = sand.u32 %s114, 1
          %s356 = smul.addr %s355, 8
          %s357 = scalar_lea.vmem [#allocation9], %s356
          %s359 = ssub.s32 128, 128
          %360 = vsyncadd %s354, %s359
          %s361 = smul.addr %s31, 128
          %s362 = scalar_lea.hbm %s3, %s361
          %s364 = sshll.u32 %s357, 4
          %s365 = int_to_ptr.vmem [resolvable:$true] %s364
          %367 = dma.hbm_to_vmem [thread:$0]  %s362, 128, %s365, %s354
        $region32: #{tpu_custom_call.1} parent=19 // pred_fallthru
          _
        // Predicated region
        $region33: #{tpu_custom_call.1} parent=19 // pred_check
          %p368 = pneg %p150
        $region34: #{tpu_custom_call.1} parent=19 // pred_check_branch
          %370 = sbr.rel (%p368) target = $region36
        $region35: #{tpu_custom_call.1} parent=19 // pred_region
          %s371 = sand.u32 %s31, 1
          %s372 = scalar_lea.sflag [#allocation11], %s371
          %s373 = sand.u32 %s140, 1
          %s374 = smul.addr %s373, 8
          %s375 = scalar_lea.vmem [#allocation10], %s374
          %s377 = ssub.s32 128, 128
          %378 = vsyncadd %s372, %s377
          %s379 = smul.addr %s31, 128
          %s380 = scalar_lea.hbm %s4, %s379
          %s382 = sshll.u32 %s375, 4
          %s383 = int_to_ptr.vmem [resolvable:$true] %s382
          %385 = dma.hbm_to_vmem [thread:$0]  %s380, 128, %s383, %s372
        $region36: #{tpu_custom_call.1} parent=19 // pred_fallthru
          _
        // Predicated region
        $region37: #{tpu_custom_call.1} parent=19 // pred_check
          %p386 = pneg %p176
        $region38: #{tpu_custom_call.1} parent=19 // pred_check_branch
          %388 = sbr.rel (%p386) target = $region40
        $region39: #{tpu_custom_call.1} parent=19 // pred_region
          %p389 = scmp.lt.s32.totalorder %s31, 1
          %s390 = scalar_select %p389, %s31, 1
          %s391 = smul.addr %s390, 8
          %s392 = scalar_lea.vmem %s5, %s391
        $region40: #{tpu_custom_call.1} parent=19 // pred_fallthru
          _
        // Predicated region
        $region41: #{tpu_custom_call.1} parent=19 // pred_check
          %p393 = pneg %p202
        $region42: #{tpu_custom_call.1} parent=19 // pred_check_branch
          %395 = sbr.rel (%p393) target = $region44
        $region43: #{tpu_custom_call.1} parent=19 // pred_region
          %s396 = sand.u32 %s31, 1
          %s397 = scalar_lea.sflag [#allocation11], %s396
          %s398 = sand.u32 %s192, 1
          %s399 = smul.addr %s398, 8
          %s400 = scalar_lea.vmem [#allocation12], %s399
          %s402 = ssub.s32 128, 128
          %403 = vsyncadd %s397, %s402
          %s404 = smul.addr %s31, 128
          %s405 = scalar_lea.hbm %s6, %s404
          %s407 = sshll.u32 %s400, 4
          %s408 = int_to_ptr.vmem [resolvable:$true] %s407
          %410 = dma.hbm_to_vmem [thread:$0]  %s405, 128, %s408, %s397
        $region44: #{tpu_custom_call.1} parent=19 // pred_fallthru
          _
        // Predicated region
        $region45: #{tpu_custom_call.1} parent=19 // pred_check
          %p411 = pneg %p228
        $region46: #{tpu_custom_call.1} parent=19 // pred_check_branch
          %413 = sbr.rel (%p411) target = $region48
        $region47: #{tpu_custom_call.1} parent=19 // pred_region
          %s414 = sand.u32 %s31, 1
          %s415 = scalar_lea.sflag [#allocation14], %s414
          %s416 = sand.u32 %s218, 1
          %s417 = smul.addr %s416, 8
          %s418 = scalar_lea.vmem [#allocation13], %s417
          %s420 = ssub.s32 128, 128
          %421 = vsyncadd %s415, %s420
          %s422 = smul.addr %s31, 128
          %s423 = scalar_lea.hbm %s7, %s422
          %s425 = sshll.u32 %s418, 4
          %s426 = int_to_ptr.vmem [resolvable:$true] %s425
          %428 = dma.hbm_to_vmem [thread:$0]  %s423, 128, %s426, %s415
        $region48: #{tpu_custom_call.1} parent=19 // pred_fallthru
          _
        // Predicated region
        $region49: #{tpu_custom_call.1} parent=19 // pred_check
          %p429 = pneg %p254
        $region50: #{tpu_custom_call.1} parent=19 // pred_check_branch
          %431 = sbr.rel (%p429) target = $region52
        $region51: #{tpu_custom_call.1} parent=19 // pred_region
          %s432 = sand.u32 %s31, 1
          %s433 = scalar_lea.sflag [#allocation14], %s432
          %s434 = sand.u32 %s244, 1
          %s435 = smul.addr %s434, 8
          %s436 = scalar_lea.vmem [#allocation15], %s435
          %s438 = ssub.s32 128, 128
          %439 = vsyncadd %s433, %s438
          %s440 = smul.addr %s31, 128
          %s441 = scalar_lea.hbm %s8, %s440
          %s443 = sshll.u32 %s436, 4
          %s444 = int_to_ptr.vmem [resolvable:$true] %s443
          %446 = dma.hbm_to_vmem [thread:$0]  %s441, 128, %s444, %s433
        $region52: #{tpu_custom_call.1} parent=19 // pred_fallthru
          _
      $region20: #{tpu_custom_call.1} parent=5 // pred_fallthru
        _
      %p447 = scmp.le.s32.totalorder 1, %s31
      %p448 = scmp.lt.s32.totalorder %s31, 3
      %p449 = pnand %p447, %p448
      %p450 = pneg %p449
      // Predicated region
      $region53: #{tpu_custom_call.1} parent=5 // pred_check
        _
      $region54: #{tpu_custom_call.1} parent=5 // pred_check_branch
        %452 = sbr.rel (%p449) target = $region56
      $region55: #{tpu_custom_call.1} parent=5 // pred_region
        %s453 = ssub.s32 %s31, 1
        // Predicated region
        $region57: #{tpu_custom_call.1} parent=55 // pred_check
          %p454 = pneg %p52
        $region58: #{tpu_custom_call.1} parent=55 // pred_check_branch
          %456 = sbr.rel (%p454) target = $region60
        $region59: #{tpu_custom_call.1} parent=55 // pred_region
          %457 = dma.done [#allocation5], 16
        $region60: #{tpu_custom_call.1} parent=55 // pred_fallthru
          _
        %s458 = sand.u32 %s65, 1
        %s459 = scalar_lea.sflag [#allocation3], %s458
        %s460 = sand.u32 %s65, 1
        %s461 = smul.addr %s460, 8
        %s462 = scalar_lea.vmem [#allocation6], %s461
        // Predicated region
        $region61: #{tpu_custom_call.1} parent=55 // pred_check
          %p463 = pneg %p78
        $region62: #{tpu_custom_call.1} parent=55 // pred_check_branch
          %465 = sbr.rel (%p463) target = $region64
        $region63: #{tpu_custom_call.1} parent=55 // pred_region
          %466 = dma.done %s459, 128
        $region64: #{tpu_custom_call.1} parent=55 // pred_fallthru
          _
        %s467 = sand.u32 %s36, 1
        %s468 = scalar_lea.sflag [#allocation8], %s467
        %s469 = sand.u32 %s91, 1
        %s470 = smul.addr %s469, 8
        %s471 = scalar_lea.vmem [#allocation7], %s470
        // Predicated region
        $region65: #{tpu_custom_call.1} parent=55 // pred_check
          %p472 = pneg %p104
        $region66: #{tpu_custom_call.1} parent=55 // pred_check_branch
          %474 = sbr.rel (%p472) target = $region68
        $region67: #{tpu_custom_call.1} parent=55 // pred_region
          %475 = dma.done %s468, 128
        $region68: #{tpu_custom_call.1} parent=55 // pred_fallthru
          _
        %s476 = sand.u32 %s36, 1
        %s477 = scalar_lea.sflag [#allocation8], %s476
        %s478 = sand.u32 %s117, 1
        %s479 = smul.addr %s478, 8
        %s480 = scalar_lea.vmem [#allocation9], %s479
        // Predicated region
        $region69: #{tpu_custom_call.1} parent=55 // pred_check
          %p481 = pneg %p130
        $region70: #{tpu_custom_call.1} parent=55 // pred_check_branch
          %483 = sbr.rel (%p481) target = $region72
        $region71: #{tpu_custom_call.1} parent=55 // pred_region
          %484 = dma.done %s477, 128
        $region72: #{tpu_custom_call.1} parent=55 // pred_fallthru
          _
        %s485 = sand.u32 %s36, 1
        %s486 = scalar_lea.sflag [#allocation11], %s485
        %s487 = sand.u32 %s143, 1
        %s488 = smul.addr %s487, 8
        %s489 = scalar_lea.vmem [#allocation10], %s488
        // Predicated region
        $region73: #{tpu_custom_call.1} parent=55 // pred_check
          %p490 = pneg %p156
        $region74: #{tpu_custom_call.1} parent=55 // pred_check_branch
          %492 = sbr.rel (%p490) target = $region76
        $region75: #{tpu_custom_call.1} parent=55 // pred_region
          %493 = dma.done %s486, 128
        $region76: #{tpu_custom_call.1} parent=55 // pred_fallthru
          _
        %s494 = sand.u32 %s36, 1
        %s495 = scalar_lea.sflag [#allocation11], %s494
        %s496 = sand.u32 %s195, 1
        %s497 = smul.addr %s496, 8
        %s498 = scalar_lea.vmem [#allocation12], %s497
        // Predicated region
        $region77: #{tpu_custom_call.1} parent=55 // pred_check
          %p499 = pneg %p208
        $region78: #{tpu_custom_call.1} parent=55 // pred_check_branch
          %501 = sbr.rel (%p499) target = $region80
        $region79: #{tpu_custom_call.1} parent=55 // pred_region
          %502 = dma.done %s495, 128
        $region80: #{tpu_custom_call.1} parent=55 // pred_fallthru
          _
        %s503 = sand.u32 %s36, 1
        %s504 = scalar_lea.sflag [#allocation14], %s503
        %s505 = sand.u32 %s221, 1
        %s506 = smul.addr %s505, 8
        %s507 = scalar_lea.vmem [#allocation13], %s506
        // Predicated region
        $region81: #{tpu_custom_call.1} parent=55 // pred_check
          %p508 = pneg %p234
        $region82: #{tpu_custom_call.1} parent=55 // pred_check_branch
          %510 = sbr.rel (%p508) target = $region84
        $region83: #{tpu_custom_call.1} parent=55 // pred_region
          %511 = dma.done %s504, 128
        $region84: #{tpu_custom_call.1} parent=55 // pred_fallthru
          _
        %s512 = sand.u32 %s36, 1
        %s513 = scalar_lea.sflag [#allocation14], %s512
        %s514 = sand.u32 %s247, 1
        %s515 = smul.addr %s514, 8
        %s516 = scalar_lea.vmem [#allocation15], %s515
        // Predicated region
        $region85: #{tpu_custom_call.1} parent=55 // pred_check
          %p517 = pneg %p260
        $region86: #{tpu_custom_call.1} parent=55 // pred_check_branch
          %519 = sbr.rel (%p517) target = $region88
        $region87: #{tpu_custom_call.1} parent=55 // pred_region
          %520 = dma.done %s513, 128
        $region88: #{tpu_custom_call.1} parent=55 // pred_fallthru
          _
        %521 = sfence
        %p522 = pneg %p52
        %p523 = pneg %p49
        %s524 = sand.u32 %s65, 1
        %s525 = scalar_lea.sflag [#allocation3], %s524
        %s526 = sand.u32 %s65, 1
        %s527 = smul.addr %s526, 8
        %s528 = scalar_lea.vmem [#allocation6], %s527
        %p529 = pneg %p78
        %p530 = pneg %p75
        %s531 = sand.u32 %s36, 1
        %s532 = scalar_lea.sflag [#allocation8], %s531
        %s533 = sand.u32 %s91, 1
        %s534 = smul.addr %s533, 8
        %s535 = scalar_lea.vmem [#allocation7], %s534
        %p536 = pneg %p104
        %p537 = pneg %p101
        %s538 = sand.u32 %s36, 1
        %s539 = scalar_lea.sflag [#allocation8], %s538
        %s540 = sand.u32 %s117, 1
        %s541 = smul.addr %s540, 8
        %s542 = scalar_lea.vmem [#allocation9], %s541
        %p543 = pneg %p130
        %p544 = pneg %p127
        %s545 = sand.u32 %s36, 1
        %s546 = scalar_lea.sflag [#allocation11], %s545
        %s547 = sand.u32 %s143, 1
        %s548 = smul.addr %s547, 8
        %s549 = scalar_lea.vmem [#allocation10], %s548
        %p550 = pneg %p156
        %p551 = pneg %p153
        %p552 = scmp.lt.s32.totalorder %s36, 1
        %s553 = scalar_select %p552, %s36, 1
        %s554 = smul.addr %s553, 8
        %s555 = scalar_lea.vmem %s5, %s554
        %p556 = pneg %p182
        %p557 = pneg %p179
        %s558 = sand.u32 %s36, 1
        %s559 = scalar_lea.sflag [#allocation11], %s558
        %s560 = sand.u32 %s195, 1
        %s561 = smul.addr %s560, 8
        %s562 = scalar_lea.vmem [#allocation12], %s561
        %p563 = pneg %p208
        %p564 = pneg %p205
        %s565 = sand.u32 %s36, 1
        %s566 = scalar_lea.sflag [#allocation14], %s565
        %s567 = sand.u32 %s221, 1
        %s568 = smul.addr %s567, 8
        %s569 = scalar_lea.vmem [#allocation13], %s568
        %p570 = pneg %p234
        %p571 = pneg %p231
        %s572 = sand.u32 %s36, 1
        %s573 = scalar_lea.sflag [#allocation14], %s572
        %s574 = sand.u32 %s247, 1
        %s575 = smul.addr %s574, 8
        %s576 = scalar_lea.vmem [#allocation15], %s575
        %p577 = pneg %p260
        %p578 = pneg %p257
        %p579 = pneg %p286
        %p580 = pneg %p283
        %s581 = sand.u32 %s273, 1
        %s582 = scalar_lea.sflag [#allocation4], %s581
        %s583 = sand.u32 %s273, 1
        %s584 = smul.addr %s583, 8
        %s585 = scalar_lea.vmem [#allocation16], %s584
        %p586 = scmp.lt.s32.totalorder %s36, 1
        %s587 = scalar_select %p586, %s36, 1
        %s588 = smul.addr %s587, 8
        %s589 = scalar_lea.vmem %s5, %s588
        %v590 = vld [vmem:[%s516] sm:$0xff]
        %v591 = vld [vmem:[%s462] sm:$0xff]
        %v592 = vmax.f32 %v591, 0.0
        %v593 = vmul.f32 %v591, %v590
        %v594 = vsub.f32 %v592, %v593
        %v595 = vand.u32 2147483647, %v591
        %v596 = vsub.f32 0.0, %v595
        %v597 = vmul.f32 %v596, 1.442695
        %v598 = vpow.pop %v597
        %v599 = vadd.f32 %v598, 1.0
        %v600 = vlog2.pop %v599
        %v601 = vmul.f32 %v600, 0.6931472
        %v602 = vmul.f32 -0.5, %v598
        %v603 = vadd.f32 %v602, 1.0
        %v604 = vmul.f32 %v603, %v598
        %v605 = vand.u32 2147483647, %v598
        %vm606 = vcmp.lt.f32.partialorder %v605, 0.0004427343
        %v607 = vsel %vm606, %v604, %v601
        %v608 = vadd.f32 %v594, %v607
        %v609 = vadd.f32 %v608, 0.0
        %s610 = sld [smem:[#allocation2]]
        %v611 = vstv %s610
        %v612 = vmul.f32 %v609, %v611
        %v613 = vadd.f32 %v612, 0.0
        %v614 = vld [vmem:[%s471] sm:$0xff]
        %v615 = vmax.f32 %v614, 0.0
        %v616 = vmul.f32 %v614, %v590
        %v617 = vsub.f32 %v615, %v616
        %v618 = vand.u32 2147483647, %v614
        %v619 = vsub.f32 0.0, %v618
        %v620 = vmul.f32 %v619, 1.442695
        %v621 = vpow.pop %v620
        %v622 = vadd.f32 %v621, 1.0
        %v623 = vlog2.pop %v622
        %v624 = vmul.f32 %v623, 0.6931472
        %v625 = vmul.f32 -0.5, %v621
        %v626 = vadd.f32 %v625, 1.0
        %v627 = vmul.f32 %v626, %v621
        %v628 = vand.u32 2147483647, %v621
        %vm629 = vcmp.lt.f32.partialorder %v628, 0.0004427343
        %v630 = vsel %vm629, %v627, %v624
        %v631 = vadd.f32 %v617, %v630
        %v632 = vadd.f32 %v631, 0.0
        %s633 = sld [smem:[#allocation2 + $0x1]]
        %v634 = vstv %s633
        %v635 = vmul.f32 %v632, %v634
        %v636 = vadd.f32 %v613, %v635
        %v637 = vld [vmem:[%s480] sm:$0xff]
        %v638 = vmax.f32 %v637, 0.0
        %v639 = vmul.f32 %v637, %v590
        %v640 = vsub.f32 %v638, %v639
        %v641 = vand.u32 2147483647, %v637
        %v642 = vsub.f32 0.0, %v641
        %v643 = vmul.f32 %v642, 1.442695
        %v644 = vpow.pop %v643
        %v645 = vadd.f32 %v644, 1.0
        %v646 = vlog2.pop %v645
        %v647 = vmul.f32 %v646, 0.6931472
        %v648 = vmul.f32 -0.5, %v644
        %v649 = vadd.f32 %v648, 1.0
        %v650 = vmul.f32 %v649, %v644
        %v651 = vand.u32 2147483647, %v644
        %vm652 = vcmp.lt.f32.partialorder %v651, 0.0004427343
        %v653 = vsel %vm652, %v650, %v647
        %v654 = vadd.f32 %v640, %v653
        %v655 = vadd.f32 %v654, 0.0
        %s656 = sld [smem:[#allocation2 + $0x2]]
        %v657 = vstv %s656
        %v658 = vmul.f32 %v655, %v657
        %v659 = vadd.f32 %v636, %v658
        %v660 = vld [vmem:[%s489] sm:$0xff]
        %v661 = vmax.f32 %v660, 0.0
        %v662 = vmul.f32 %v660, %v590
        %v663 = vsub.f32 %v661, %v662
        %v664 = vand.u32 2147483647, %v660
        %v665 = vsub.f32 0.0, %v664
        %v666 = vmul.f32 %v665, 1.442695
        %v667 = vpow.pop %v666
        %v668 = vadd.f32 %v667, 1.0
        %v669 = vlog2.pop %v668
        %v670 = vmul.f32 %v669, 0.6931472
        %v671 = vmul.f32 -0.5, %v667
        %v672 = vadd.f32 %v671, 1.0
        %v673 = vmul.f32 %v672, %v667
        %v674 = vand.u32 2147483647, %v667
        %vm675 = vcmp.lt.f32.partialorder %v674, 0.0004427343
        %v676 = vsel %vm675, %v673, %v670
        %v677 = vadd.f32 %v663, %v676
        %v678 = vadd.f32 %v677, 0.0
        %s679 = sld [smem:[#allocation2 + $0x3]]
        %v680 = vstv %s679
        %v681 = vmul.f32 %v678, %v680
        %v682 = vadd.f32 %v659, %v681
        %v683 = vld [vmem:[%s589] sm:$0xff]
        %v684 = vmax.f32 %v683, 0.0
        %v685 = vmul.f32 %v683, %v590
        %v686 = vsub.f32 %v684, %v685
        %v687 = vand.u32 2147483647, %v683
        %v688 = vsub.f32 0.0, %v687
        %v689 = vmul.f32 %v688, 1.442695
        %v690 = vpow.pop %v689
        %v691 = vadd.f32 %v690, 1.0
        %v692 = vlog2.pop %v691
        %v693 = vmul.f32 %v692, 0.6931472
        %v694 = vmul.f32 -0.5, %v690
        %v695 = vadd.f32 %v694, 1.0
        %v696 = vmul.f32 %v695, %v690
        %v697 = vand.u32 2147483647, %v690
        %vm698 = vcmp.lt.f32.partialorder %v697, 0.0004427343
        %v699 = vsel %vm698, %v696, %v693
        %v700 = vadd.f32 %v686, %v699
        %v701 = vadd.f32 %v700, 0.0
        %s702 = sld [smem:[#allocation2 + $0x4]]
        %v703 = vstv %s702
        %v704 = vmul.f32 %v701, %v703
        %v705 = vadd.f32 %v682, %v704
        %v706 = vld [vmem:[%s498] sm:$0xff]
        %v707 = vmax.f32 %v706, 0.0
        %v708 = vmul.f32 %v706, %v590
        %v709 = vsub.f32 %v707, %v708
        %v710 = vand.u32 2147483647, %v706
        %v711 = vsub.f32 0.0, %v710
        %v712 = vmul.f32 %v711, 1.442695
        %v713 = vpow.pop %v712
        %v714 = vadd.f32 %v713, 1.0
        %v715 = vlog2.pop %v714
        %v716 = vmul.f32 %v715, 0.6931472
        %v717 = vmul.f32 -0.5, %v713
        %v718 = vadd.f32 %v717, 1.0
        %v719 = vmul.f32 %v718, %v713
        %v720 = vand.u32 2147483647, %v713
        %vm721 = vcmp.lt.f32.partialorder %v720, 0.0004427343
        %v722 = vsel %vm721, %v719, %v716
        %v723 = vadd.f32 %v709, %v722
        %v724 = vadd.f32 %v723, 0.0
        %s725 = sld [smem:[#allocation2 + $0x5]]
        %v726 = vstv %s725
        %v727 = vmul.f32 %v724, %v726
        %v728 = vadd.f32 %v705, %v727
        %v729 = vld [vmem:[%s507] sm:$0xff]
        %v730 = vmax.f32 %v729, 0.0
        %v731 = vmul.f32 %v729, %v590
        %v732 = vsub.f32 %v730, %v731
        %v733 = vand.u32 2147483647, %v729
        %v734 = vsub.f32 0.0, %v733
        %v735 = vmul.f32 %v734, 1.442695
        %v736 = vpow.pop %v735
        %v737 = vadd.f32 %v736, 1.0
        %v738 = vlog2.pop %v737
        %v739 = vmul.f32 %v738, 0.6931472
        %v740 = vmul.f32 -0.5, %v736
        %v741 = vadd.f32 %v740, 1.0
        %v742 = vmul.f32 %v741, %v736
        %v743 = vand.u32 2147483647, %v736
        %vm744 = vcmp.lt.f32.partialorder %v743, 0.0004427343
        %v745 = vsel %vm744, %v742, %v739
        %v746 = vadd.f32 %v732, %v745
        %v747 = vadd.f32 %v746, 0.0
        %s748 = sld [smem:[#allocation2 + $0x6]]
        %v749 = vstv %s748
        %v750 = vmul.f32 %v747, %v749
        %v751 = vadd.f32 %v728, %v750
        %752 = vst [vmem:[%s585] sm:$0xff] %v751
        %s753 = sand.u32 %s273, 1
        %s754 = scalar_lea.sflag [#allocation4], %s753
        %s755 = sand.u32 %s273, 1
        %s756 = smul.addr %s755, 8
        %s757 = scalar_lea.vmem [#allocation16], %s756
        // Predicated region
        $region89: #{tpu_custom_call.1} parent=55 // pred_check
          %p758 = pneg %p283
        $region90: #{tpu_custom_call.1} parent=55 // pred_check_branch
          %760 = sbr.rel (%p758) target = $region92
        $region91: #{tpu_custom_call.1} parent=55 // pred_region
          %s762 = ssub.s32 128, 128
          %763 = vsyncadd %s754, %s762
          %s764 = smul.addr %s36, 128
          %s765 = scalar_lea.hbm %s9, %s764
          %s767 = sshll.u32 %s757, 4
          %s768 = int_to_ptr.vmem [resolvable:$true] %s767
          %770 = dma.vmem_to_hbm [thread:$0]  %s768, 128, %s765, %s754
        $region92: #{tpu_custom_call.1} parent=55 // pred_fallthru
          _
      $region56: #{tpu_custom_call.1} parent=5 // pred_fallthru
        _
      %p771 = scmp.le.s32.totalorder 2, %s31
      // Predicated region
      $region93: #{tpu_custom_call.1} parent=5 // pred_check
        %p772 = pneg %p771
      $region94: #{tpu_custom_call.1} parent=5 // pred_check_branch
        %774 = sbr.rel (%p772) target = $region96
      $region95: #{tpu_custom_call.1} parent=5 // pred_region
        %s775 = ssub.s32 %s31, 2
        // Predicated region
        $region97: #{tpu_custom_call.1} parent=95 // pred_check
          %p776 = pneg %p289
        $region98: #{tpu_custom_call.1} parent=95 // pred_check_branch
          %778 = sbr.rel (%p776) target = $region100
        $region99: #{tpu_custom_call.1} parent=95 // pred_region
          %s779 = sand.u32 %s274, 1
          %s780 = scalar_lea.sflag [#allocation4], %s779
          %s781 = sand.u32 %s274, 1
          %s782 = smul.addr %s781, 8
          %s783 = scalar_lea.vmem [#allocation16], %s782
          %784 = dma.done %s780, 128
        $region100: #{tpu_custom_call.1} parent=95 // pred_fallthru
          _
      $region96: #{tpu_custom_call.1} parent=5 // pred_fallthru
        _
    $region6: #{tpu_custom_call.1} parent=1 // loop_footer
      %s35 = sadd.s32 1, %s31
    $region7: #{tpu_custom_call.1} parent=1 // loop_footer_branch
      %30 = sbr.rel target = $region3
    $region8: #{tpu_custom_call.1} parent=1 // loop_exit
      _
    %785 = vsyncpa [#allocation3], 1
    %s786 = scalar_lea.sflag [#allocation3], 1
    %787 = vsyncpa %s786, 1
    %788 = vsyncpa [#allocation8], 1
    %s789 = scalar_lea.sflag [#allocation8], 1
    %790 = vsyncpa %s789, 1
    %791 = vsyncpa [#allocation11], 1
    %s792 = scalar_lea.sflag [#allocation11], 1
    %793 = vsyncpa %s792, 1
    %794 = vsyncpa [#allocation14], 1
    %s795 = scalar_lea.sflag [#allocation14], 1
    %796 = vsyncpa %s795, 1
    %797 = vsyncpa [#allocation4], 1
    %s798 = scalar_lea.sflag [#allocation4], 1
    %799 = vsyncpa %s798, 1
    %800 = vsyncpa [#allocation5], 1
    %s801 = scalar_lea.sflag [#allocation5], 1
    %802 = vsyncpa %s801, 1

</llo_original>
